<compile_context>
chip_gen: v7x
topology: tpu7x:2x2x1
jax: 0.10.0
libtpu: 0.0.40
codegen_flags: <defaults>
</compile_context>

<pallas_src>
import functools

import numpy as np
import jax
import jax.numpy as jnp
from jax.experimental import pallas as pl
from jax.experimental.pallas import tpu as pltpu


def _hexblock2_kernel(x_ref, w_ref, b_ref, o_ref, *, width):
    """One batch element per grid step.

    x_ref: (1, C, H*W)      input, NCHW with spatial flattened onto lanes (f32)
    w_ref: (Cout, 7*C)      fused transposed weights (f32)
    b_ref: (Cout, 1)        bias (f32)
    o_ref: (1, Cout, H*W)   output (f32) — last dim is lane-dense (multiple of 128)
    """
    C = x_ref.shape[1]
    HW = x_ref.shape[2]
    W = width

    x = x_ref[0]                                        # (C, HW) f32

    def shift(v, s):
        # result[:, m] = v[:, m - s], zero-filled outside [0, HW).
        # Row over/underflow of the flattened index m = r*W + c IS the top/bottom halo,
        # so the zero fill handles the r==0 / r==H-1 boundaries automatically.
        pad = jnp.zeros((v.shape[0], abs(s)), v.dtype)
        if s > 0:
            return jnp.concatenate([pad, v[:, :HW - s]], axis=1)
        return jnp.concatenate([v[:, -s:], pad], axis=1)

    # Column / parity masks (static W); computed once per step on the VPU, which has slack.
    col = jax.lax.broadcasted_iota(jnp.int32, (C, HW), 1) % W
    even_c = (col % 2) == 0
    first_c = col == 0
    last_c = col == (W - 1)
    zero = jnp.zeros_like(x)

    up     = shift(x,  W)            # x[r-1, c  ]
    down   = shift(x, -W)            # x[r+1, c  ]
    l_same = shift(x,  1)            # x[r  , c-1]
    r_same = shift(x, -1)            # x[r  , c+1]
    l_up   = shift(x,  W + 1)        # x[r-1, c-1]
    r_up   = shift(x,  W - 1)        # x[r-1, c+1]
    l_down = shift(x, -(W - 1))      # x[r+1, c-1]
    r_down = shift(x, -(W + 1))      # x[r+1, c+1]

    # hexagdly offset grid: odd columns sit half a cell lower than even columns.
    ul = jnp.where(first_c, zero, jnp.where(even_c, l_up,   l_same))   # upper-left
    ur = jnp.where(last_c,  zero, jnp.where(even_c, r_up,   r_same))   # upper-right
    ll = jnp.where(first_c, zero, jnp.where(even_c, l_same, l_down))   # lower-left
    lr = jnp.where(last_c,  zero, jnp.where(even_c, r_same, r_down))   # lower-right

    # Single fused MXU matmul, transposed so the output lane dim is H*W (lane-dense store).
    a = jnp.concatenate([up, x, down, ul, ur, ll, lr], axis=0)            # (7*C, HW)
    acc = jnp.dot(w_ref[...], a, preferred_element_type=jnp.float32)      # (Cout, HW)

    acc = acc + b_ref[...] + x        # bias + residual (requires Cin == Cout), all f32
    o_ref[0] = jnp.maximum(acc, 0.0).astype(o_ref.dtype)


def _fuse_weights(w0, w1):
    """(3,C,Cout) + (2,2,C,Cout) -> (7*C, Cout); row order matches the kernel's tap concat."""
    return jnp.concatenate(
        [w0[0], w0[1], w0[2],            # same-column taps: r-1, r, r+1
         w1[0, 0], w1[0, 1],             # upper-left, upper-right
         w1[1, 0], w1[1, 1]],            # lower-left, lower-right
        axis=0)


@jax.jit
def hexblock2_forward(x_nchw, w0, w1, b):
    """x_nchw: (N, C, H, W); w0: (3, C, Cout); w1: (2, 2, C, Cout); b: (Cout,)."""
    N, C, H, W = x_nchw.shape
    Cout = w0.shape[-1]
    assert C == Cout, "HexBlock2 residual path requires in_channels == out_channels"
    HW = H * W

    # No transposes / pads / parity pre-shifts in the wrapper: contiguous reshapes only,
    # so there are no extra HBM passes around the (memory-bound) kernel.
    x2 = x_nchw.reshape(N, C, HW).astype(jnp.float32)
    wf_t = jnp.transpose(_fuse_weights(w0, w1)).astype(jnp.float32)   # (Cout, 7*C)
    b2 = b.reshape(Cout, 1).astype(jnp.float32)

    # Batch grid marked "parallel" so v7x can shard it across both TensorCores.
    # TODO(synk): for large H*W additionally tile the spatial axis (halo rows via index_map)
    #             so blocks fit v7x's 64 MiB VMEM with double-buffered pipelining.
    out = pl.pallas_call(
        functools.partial(_hexblock2_kernel, width=W),
        out_shape=jax.ShapeDtypeStruct((N, Cout, HW), jnp.float32),
        grid=(N,),
        in_specs=[
            pl.BlockSpec((1, C, HW), lambda n: (n, 0, 0)),
            pl.BlockSpec((Cout, 7 * C), lambda n: (0, 0)),
            pl.BlockSpec((Cout, 1), lambda n: (0, 0)),
        ],
        out_specs=pl.BlockSpec((1, Cout, HW), lambda n: (n, 0, 0)),
        compiler_params=pltpu.CompilerParams(dimension_semantics=("parallel",)),
    )(x2, wf_t, b2)

    return out.reshape(N, Cout, H, W)


def hexblock2_ref(x_nchw, w0, w1, b):
    """Plain-JAX (high-precision) reference of the same hex conv + residual + ReLU."""
    x = jnp.transpose(x_nchw, (0, 2, 3, 1)).astype(jnp.float32)
    N, H, W, C = x.shape
    xp = jnp.pad(x, ((0, 0), (1, 1), (1, 1), (0, 0)))

    def tap(dr, dc):
        return xp[:, 1 + dr:1 + dr + H, 1 + dc:1 + dc + W, :]

    even = (jnp.arange(W) % 2 == 0)[None, None, :, None]
    t_l, t_r = tap(0, -1), tap(0, 1)
    taps = [tap(-1, 0), tap(0, 0), tap(1, 0),
            jnp.where(even, tap(-1, -1), t_l),    # upper-left
            jnp.where(even, tap(-1, 1), t_r),     # upper-right
            jnp.where(even, t_l, tap(1, -1)),     # lower-left
            jnp.where(even, t_r, tap(1, 1))]      # lower-right
    a = jnp.concatenate(taps, axis=-1)            # (N, H, W, 7*C)
    wf = _fuse_weights(w0, w1)
    acc = jnp.einsum('nhwk,kd->nhwd', a, wf,
                     precision=jax.lax.Precision.HIGHEST,
                     preferred_element_type=jnp.float32)
    out = jnp.maximum(acc + b + x, 0.0)
    return jnp.transpose(out, (0, 3, 1, 2))


if __name__ == "__main__":
    # HexBlock2(in_channels=4, out_channels=4, kernal_size=1, stride=1, residual=True)
    N, C, H, W = 2, 4, 16, 16
    key = jax.random.PRNGKey(0)
    kx, k0, k1, kb = jax.random.split(key, 4)

    x = jax.random.normal(kx, (N, C, H, W), jnp.float32)
    fan_in = C * 7
    w0 = jax.random.normal(k0, (3, C, C), jnp.float32) / np.sqrt(fan_in)      # same-column taps
    w1 = jax.random.normal(k1, (2, 2, C, C), jnp.float32) / np.sqrt(fan_in)   # adjacent-column taps
    b = jax.random.normal(kb, (C,), jnp.float32) * 0.01

    out = jax.block_until_ready(hexblock2_forward(x, w0, w1, b))
    assert out.shape == (N, C, H, W) and out.dtype == jnp.float32

    # Tolerance covers the MXU's default f32-matmul pass behaviour (worst case ~1e-3 abs);
    # any semantic error (wrong tap / parity / halo) would be O(0.1-1) and still be caught.
    ref = jax.block_until_ready(hexblock2_ref(x, w0, w1, b))
    np.testing.assert_allclose(np.asarray(out), np.asarray(ref), rtol=1e-2, atol=1e-2)

    print("KERNEL_OK")
</pallas_src>

<mosaic_0001>
module attributes {stable_mosaic.version = 11 : i64} {
  func.func @_hexblock2_kernel(%arg0: i32, %arg1: memref<1x4x256xf32, #tpu.memory_space<vmem>>, %arg2: memref<4x28xf32, #tpu.memory_space<vmem>>, %arg3: memref<4x1xf32, #tpu.memory_space<vmem>>, %arg4: memref<1x4x256xf32, #tpu.memory_space<vmem>>) attributes {dimension_semantics = [#tpu.dimension_semantics<parallel>], iteration_bounds = array<i64: 2>, scalar_prefetch = 0 : i64, scratch_operands = 0 : i64, tpu.core_type = #tpu.core_type<tc>, window_params = [{transform_indices = @transform_0, window_bounds = array<i64: 1, 4, 256>}, {pipeline_mode = #tpu.pipeline_mode<synchronous>, transform_indices = @transform_1, window_bounds = array<i64: 4, 28>}, {pipeline_mode = #tpu.pipeline_mode<synchronous>, transform_indices = @transform_2, window_bounds = array<i64: 4, 1>}, {transform_indices = @transform_3, window_bounds = array<i64: 1, 4, 256>}]} {
    %c0 = arith.constant 0 : index
    %c0_0 = arith.constant 0 : index
    %c0_1 = arith.constant 0 : index
    %0 = vector.load %arg1[%c0, %c0_0, %c0_1] : memref<1x4x256xf32, #tpu.memory_space<vmem>>, vector<1x4x256xf32>
    %1 = vector.shape_cast %0 : vector<1x4x256xf32> to vector<4x256xf32>
    %2 = tpu.iota {dimensions = array<i32: 1>} : vector<4x256xi32>
    %c16_i32 = arith.constant 16 : i32
    %c0_i32 = arith.constant 0 : i32
    %3 = arith.cmpi eq, %c16_i32, %c0_i32 : i32
    %c1_i32 = arith.constant 1 : i32
    %4 = arith.select %3, %c1_i32, %c16_i32 : i32
    %5 = vector.broadcast %4 : i32 to vector<4x256xi32>
    %6 = arith.remsi %2, %5 : vector<4x256xi32>
    %c0_i32_2 = arith.constant 0 : i32
    %7 = vector.broadcast %c0_i32_2 : i32 to vector<4x256xi32>
    %8 = arith.cmpi ne, %6, %7 : vector<4x256xi32>
    %c0_i32_3 = arith.constant 0 : i32
    %9 = vector.broadcast %c0_i32_3 : i32 to vector<4x256xi32>
    %10 = arith.cmpi slt, %6, %9 : vector<4x256xi32>
    %c0_i32_4 = arith.constant 0 : i32
    %11 = arith.cmpi slt, %4, %c0_i32_4 : i32
    %12 = vector.broadcast %11 : i1 to vector<4x256xi1>
    %13 = vector.broadcast %12 : vector<4x256xi1> to vector<4x256xi1>
    %14 = arith.xori %10, %13 : vector<4x256xi1>
    %15 = arith.andi %14, %8 : vector<4x256xi1>
    %16 = vector.broadcast %4 : i32 to vector<4x256xi32>
    %17 = arith.addi %6, %16 : vector<4x256xi32>
    %18 = arith.select %15, %17, %6 : vector<4x256xi1>, vector<4x256xi32>
    %c2_i32 = arith.constant 2 : i32
    %c0_i32_5 = arith.constant 0 : i32
    %19 = arith.cmpi eq, %c2_i32, %c0_i32_5 : i32
    %c1_i32_6 = arith.constant 1 : i32
    %20 = arith.select %19, %c1_i32_6, %c2_i32 : i32
    %21 = vector.broadcast %20 : i32 to vector<4x256xi32>
    %22 = arith.remsi %18, %21 : vector<4x256xi32>
    %c0_i32_7 = arith.constant 0 : i32
    %23 = vector.broadcast %c0_i32_7 : i32 to vector<4x256xi32>
    %24 = arith.cmpi ne, %22, %23 : vector<4x256xi32>
    %c0_i32_8 = arith.constant 0 : i32
    %25 = vector.broadcast %c0_i32_8 : i32 to vector<4x256xi32>
    %26 = arith.cmpi slt, %22, %25 : vector<4x256xi32>
    %c0_i32_9 = arith.constant 0 : i32
    %27 = arith.cmpi slt, %20, %c0_i32_9 : i32
    %28 = vector.broadcast %27 : i1 to vector<4x256xi1>
    %29 = vector.broadcast %28 : vector<4x256xi1> to vector<4x256xi1>
    %30 = arith.xori %26, %29 : vector<4x256xi1>
    %31 = arith.andi %30, %24 : vector<4x256xi1>
    %32 = vector.broadcast %20 : i32 to vector<4x256xi32>
    %33 = arith.addi %22, %32 : vector<4x256xi32>
    %34 = arith.select %31, %33, %22 : vector<4x256xi1>, vector<4x256xi32>
    %c0_i32_10 = arith.constant 0 : i32
    %35 = vector.broadcast %c0_i32_10 : i32 to vector<4x256xi32>
    %36 = arith.cmpi eq, %34, %35 : vector<4x256xi32>
    %c0_i32_11 = arith.constant 0 : i32
    %37 = vector.broadcast %c0_i32_11 : i32 to vector<4x256xi32>
    %38 = arith.cmpi eq, %18, %37 : vector<4x256xi32>
    %c15_i32 = arith.constant 15 : i32
    %39 = vector.broadcast %c15_i32 : i32 to vector<4x256xi32>
    %40 = arith.cmpi eq, %18, %39 : vector<4x256xi32>
    %cst = arith.constant 0.000000e+00 : f32
    %41 = vector.broadcast %cst : f32 to vector<4x256xf32>
    %cst_12 = arith.constant 0.000000e+00 : f32
    %42 = vector.broadcast %cst_12 : f32 to vector<4x16xf32>
    %43 = vector.extract_strided_slice %1 {offsets = [0, 0], sizes = [4, 240], strides = [1, 1]} : vector<4x256xf32> to vector<4x240xf32>
    %44 = tpu.concatenate %42, %43 in 1 : vector<4x16xf32>, vector<4x240xf32> -> vector<4x256xf32>
    %cst_13 = arith.constant 0.000000e+00 : f32
    %45 = vector.broadcast %cst_13 : f32 to vector<4x16xf32>
    %46 = vector.extract_strided_slice %1 {offsets = [0, 16], sizes = [4, 240], strides = [1, 1]} : vector<4x256xf32> to vector<4x240xf32>
    %47 = tpu.concatenate %46, %45 in 1 : vector<4x240xf32>, vector<4x16xf32> -> vector<4x256xf32>
    %cst_14 = arith.constant 0.000000e+00 : f32
    %48 = vector.broadcast %cst_14 : f32 to vector<4x1xf32>
    %49 = vector.extract_strided_slice %1 {offsets = [0, 0], sizes = [4, 255], strides = [1, 1]} : vector<4x256xf32> to vector<4x255xf32>
    %50 = tpu.concatenate %48, %49 in 1 : vector<4x1xf32>, vector<4x255xf32> -> vector<4x256xf32>
    %cst_15 = arith.constant 0.000000e+00 : f32
    %51 = vector.broadcast %cst_15 : f32 to vector<4x1xf32>
    %52 = vector.extract_strided_slice %1 {offsets = [0, 1], sizes = [4, 255], strides = [1, 1]} : vector<4x256xf32> to vector<4x255xf32>
    %53 = tpu.concatenate %52, %51 in 1 : vector<4x255xf32>, vector<4x1xf32> -> vector<4x256xf32>
    %cst_16 = arith.constant 0.000000e+00 : f32
    %54 = vector.broadcast %cst_16 : f32 to vector<4x17xf32>
    %55 = vector.extract_strided_slice %1 {offsets = [0, 0], sizes = [4, 239], strides = [1, 1]} : vector<4x256xf32> to vector<4x239xf32>
    %56 = tpu.concatenate %54, %55 in 1 : vector<4x17xf32>, vector<4x239xf32> -> vector<4x256xf32>
    %cst_17 = arith.constant 0.000000e+00 : f32
    %57 = vector.broadcast %cst_17 : f32 to vector<4x15xf32>
    %58 = vector.extract_strided_slice %1 {offsets = [0, 0], sizes = [4, 241], strides = [1, 1]} : vector<4x256xf32> to vector<4x241xf32>
    %59 = tpu.concatenate %57, %58 in 1 : vector<4x15xf32>, vector<4x241xf32> -> vector<4x256xf32>
    %cst_18 = arith.constant 0.000000e+00 : f32
    %60 = vector.broadcast %cst_18 : f32 to vector<4x15xf32>
    %61 = vector.extract_strided_slice %1 {offsets = [0, 15], sizes = [4, 241], strides = [1, 1]} : vector<4x256xf32> to vector<4x241xf32>
    %62 = tpu.concatenate %61, %60 in 1 : vector<4x241xf32>, vector<4x15xf32> -> vector<4x256xf32>
    %cst_19 = arith.constant 0.000000e+00 : f32
    %63 = vector.broadcast %cst_19 : f32 to vector<4x17xf32>
    %64 = vector.extract_strided_slice %1 {offsets = [0, 17], sizes = [4, 239], strides = [1, 1]} : vector<4x256xf32> to vector<4x239xf32>
    %65 = tpu.concatenate %64, %63 in 1 : vector<4x239xf32>, vector<4x17xf32> -> vector<4x256xf32>
    %66 = arith.select %36, %56, %50 : vector<4x256xi1>, vector<4x256xf32>
    %67 = arith.select %38, %41, %66 : vector<4x256xi1>, vector<4x256xf32>
    %68 = arith.select %36, %59, %53 : vector<4x256xi1>, vector<4x256xf32>
    %69 = arith.select %40, %41, %68 : vector<4x256xi1>, vector<4x256xf32>
    %70 = arith.select %36, %50, %62 : vector<4x256xi1>, vector<4x256xf32>
    %71 = arith.select %38, %41, %70 : vector<4x256xi1>, vector<4x256xf32>
    %72 = arith.select %36, %53, %65 : vector<4x256xi1>, vector<4x256xf32>
    %73 = arith.select %40, %41, %72 : vector<4x256xi1>, vector<4x256xf32>
    %74 = tpu.concatenate %44, %1, %47, %67, %69, %71, %73 in 0 : vector<4x256xf32>, vector<4x256xf32>, vector<4x256xf32>, vector<4x256xf32>, vector<4x256xf32>, vector<4x256xf32>, vector<4x256xf32> -> vector<28x256xf32>
    %c0_20 = arith.constant 0 : index
    %c0_21 = arith.constant 0 : index
    %75 = vector.load %arg2[%c0_20, %c0_21] : memref<4x28xf32, #tpu.memory_space<vmem>>, vector<4x28xf32>
    %cst_22 = arith.constant dense<0.000000e+00> : vector<4x256xf32>
    %76 = tpu.matmul %75, %74, %cst_22 {dimension_numbers = #tpu.dot_dimension_numbers<[1], [0], [0], [1], [0, 0, 1, 1], [], []>} : vector<4x28xf32>, vector<28x256xf32>, vector<4x256xf32> -> vector<4x256xf32>
    %c0_23 = arith.constant 0 : index
    %c0_24 = arith.constant 0 : index
    %77 = vector.load %arg3[%c0_23, %c0_24] : memref<4x1xf32, #tpu.memory_space<vmem>>, vector<4x1xf32>
    %78 = vector.broadcast %77 : vector<4x1xf32> to vector<4x256xf32>
    %79 = arith.addf %76, %78 : vector<4x256xf32>
    %80 = arith.addf %79, %1 : vector<4x256xf32>
    %cst_25 = arith.constant 0.000000e+00 : f32
    %81 = vector.broadcast %cst_25 : f32 to vector<4x256xf32>
    %82 = arith.maximumf %80, %81 : vector<4x256xf32>
    %c0_26 = arith.constant 0 : index
    %c0_27 = arith.constant 0 : index
    %c0_28 = arith.constant 0 : index
    %83 = vector.load %arg4[%c0_26, %c0_27, %c0_28] : memref<1x4x256xf32, #tpu.memory_space<vmem>>, vector<1x4x256xf32>
    %84 = vector.shape_cast %83 : vector<1x4x256xf32> to vector<4x256xf32>
    %85 = vector.shape_cast %82 : vector<4x256xf32> to vector<1x4x256xf32>
    tpu.vector_store %arg4[%c0_26, %c0_27, %c0_28], %85 {strides = array<i32>} : memref<1x4x256xf32, #tpu.memory_space<vmem>>, vector<1x4x256xf32>,
    return
  }
  func.func @transform_0(%arg0: i32) -> (i32, i32, i32) {
    %c0_i32 = arith.constant 0 : i32
    %c0_i32_0 = arith.constant 0 : i32
    %c0_i32_1 = arith.constant 0 : i32
    return %arg0, %c0_i32, %c0_i32_0 : i32, i32, i32
  }
  func.func @transform_1(%arg0: i32) -> (i32, i32) {
    %c0_i32 = arith.constant 0 : i32
    %c0_i32_0 = arith.constant 0 : i32
    %c0_i32_1 = arith.constant 0 : i32
    return %c0_i32, %c0_i32_0 : i32, i32
  }
  func.func @transform_2(%arg0: i32) -> (i32, i32) {
    %c0_i32 = arith.constant 0 : i32
    %c0_i32_0 = arith.constant 0 : i32
    %c0_i32_1 = arith.constant 0 : i32
    return %c0_i32, %c0_i32_0 : i32, i32
  }
  func.func @transform_3(%arg0: i32) -> (i32, i32, i32) {
    %c0_i32 = arith.constant 0 : i32
    %c0_i32_0 = arith.constant 0 : i32
    %c0_i32_1 = arith.constant 0 : i32
    return %arg0, %c0_i32, %c0_i32_0 : i32, i32, i32
  }
}

</mosaic_0001>

<llo_original>
// kernel: hexblock2_forward.1
$region0: #{hexblock2_forward.1}
  #allocation0 [shape = 'u32[]', space=smem, size = 0x4, offset = 0x4, fixed_abs, tag = 'smem constant byte address 0x4 - core index']
  #allocation1 [shape = 'u32[144,128]{1,0:T(1,128)}', space=vmem, size = 0x12000, scoped, tag = 'internal scratch']
  %s0 = inlined_call_operand.vmem [shape: f32[2,4,256], index: 0, kind: input, shape index: {}]
  %s1 = inlined_call_operand.vmem [shape: f32[4,28], index: 1, kind: input, shape index: {}]
  %s2 = inlined_call_operand.vmem [shape: f32[4,1], index: 2, kind: input, shape index: {}]
  %s3 = inlined_call_operand.vmem [shape: f32[2,4,256], index: 3, kind: output, shape index: {}]
  %s4 = sld [smem:[#allocation0]]
  $region45: #{hexblock2_forward.1} parent=0
    _
  %s6 = ssub.s32 1, %s4
  %s7 = scalar_select 0, %s6, %s4
  loop: start=0, step=1, limit=4
  $region2: #{hexblock2_forward.1} parent=0 // loop_pre_header
    _
  $region3: #{hexblock2_forward.1} parent=0 // loop_header
    %s9 = sphi 0, %s13
    %p10 = scmp.ge.s32.totalorder %s9, 4
    %s19 = sphi 0, %s21
    %s22 = sphi 0, %s19
    %s23 = sphi 0, %s22
    %s39 = sphi 0, %s23
    %s43 = sphi 0, %s43
    %s45 = sphi 0, %s43
    %s46 = sphi 0, %s45
    %s60 = sphi 0, %s46
    %s64 = sphi 0, %s64
    %s66 = sphi 0, %s64
    %s67 = sphi 0, %s66
    %s81 = sphi 0, %s67
    %s87 = sphi 0, %s89
    %s90 = sphi 0, %s87
    %s91 = sphi 0, %s90
    %s107 = sphi 0, %s91
  $region4: #{hexblock2_forward.1} parent=0 // loop_header_branch
    %12 = sbr.rel (%p10) target = $region8
  $region5: #{hexblock2_forward.1} parent=0 // loop_body
    %s14 = ssub.s32 %s9, 1
    %s15 = ssub.s32 %s9, 2
    %s16 = sadd.s32 %s9, 1
    %s17 = ssub.s32 %s9, %s16
    %p18 = scmp.eq.s32.totalorder %s17, 0
    %s20 = sadd.s32 %s19, 1
    %s21 = scalar_select %p18, %s19, %s20
    %p24 = pneg %p18
    %p25 = scmp.eq.s32.totalorder %s9, 1
    %p26 = por %p24, %p25
    %p27 = scmp.ne.s32.totalorder %s19, %s22
    %p28 = scmp.eq.s32.totalorder %s9, 0
    %p29 = por %p27, %p28
    %p30 = scmp.ne.s32.totalorder %s19, %s22
    %p31 = scmp.eq.s32.totalorder %s14, 1
    %p32 = por %p30, %p31
    %p33 = scmp.ne.s32.totalorder %s22, %s23
    %p34 = scmp.eq.s32.totalorder %s14, 0
    %p35 = por %p33, %p34
    %p36 = scmp.ne.s32.totalorder %s22, %s23
    %p37 = scmp.eq.s32.totalorder %s15, 1
    %p38 = por %p36, %p37
    %p40 = scmp.ne.s32.totalorder %s23, %s39
    %p41 = scmp.eq.s32.totalorder %s15, 0
    %p42 = por %p40, %p41
    %s44 = sadd.s32 %s43, 1
    %p47 = scmp.eq.s32.totalorder %s9, 1
    %p48 = scmp.ne.s32.totalorder %s43, %s45
    %p49 = scmp.eq.s32.totalorder %s9, 0
    %p50 = por %p48, %p49
    %p51 = scmp.ne.s32.totalorder %s43, %s45
    %p52 = scmp.eq.s32.totalorder %s14, 1
    %p53 = por %p51, %p52
    %p54 = scmp.ne.s32.totalorder %s45, %s46
    %p55 = scmp.eq.s32.totalorder %s14, 0
    %p56 = por %p54, %p55
    %p57 = scmp.ne.s32.totalorder %s45, %s46
    %p58 = scmp.eq.s32.totalorder %s15, 1
    %p59 = por %p57, %p58
    %p61 = scmp.ne.s32.totalorder %s46, %s60
    %p62 = scmp.eq.s32.totalorder %s15, 0
    %p63 = por %p61, %p62
    %s65 = sadd.s32 %s64, 1
    %p68 = scmp.eq.s32.totalorder %s9, 1
    %p69 = scmp.ne.s32.totalorder %s64, %s66
    %p70 = scmp.eq.s32.totalorder %s9, 0
    %p71 = por %p69, %p70
    %p72 = scmp.ne.s32.totalorder %s64, %s66
    %p73 = scmp.eq.s32.totalorder %s14, 1
    %p74 = por %p72, %p73
    %p75 = scmp.ne.s32.totalorder %s66, %s67
    %p76 = scmp.eq.s32.totalorder %s14, 0
    %p77 = por %p75, %p76
    %p78 = scmp.ne.s32.totalorder %s66, %s67
    %p79 = scmp.eq.s32.totalorder %s15, 1
    %p80 = por %p78, %p79
    %p82 = scmp.ne.s32.totalorder %s67, %s81
    %p83 = scmp.eq.s32.totalorder %s15, 0
    %p84 = por %p82, %p83
    %s85 = ssub.s32 %s9, %s16
    %p86 = scmp.eq.s32.totalorder %s85, 0
    %s88 = sadd.s32 %s87, 1
    %s89 = scalar_select %p86, %s87, %s88
    %p92 = pneg %p86
    %p93 = scmp.eq.s32.totalorder %s9, 1
    %p94 = por %p92, %p93
    %p95 = scmp.ne.s32.totalorder %s87, %s90
    %p96 = scmp.eq.s32.totalorder %s9, 0
    %p97 = por %p95, %p96
    %p98 = scmp.ne.s32.totalorder %s87, %s90
    %p99 = scmp.eq.s32.totalorder %s14, 1
    %p100 = por %p98, %p99
    %p101 = scmp.ne.s32.totalorder %s90, %s91
    %p102 = scmp.eq.s32.totalorder %s14, 0
    %p103 = por %p101, %p102
    %p104 = scmp.ne.s32.totalorder %s90, %s91
    %p105 = scmp.eq.s32.totalorder %s15, 1
    %p106 = por %p104, %p105
    %p108 = scmp.ne.s32.totalorder %s91, %s107
    %p109 = scmp.eq.s32.totalorder %s15, 0
    %p110 = por %p108, %p109
    %p111 = scmp.le.s32.totalorder 1, %s9
    %p112 = scmp.lt.s32.totalorder %s9, 3
    %p113 = pnand %p111, %p112
    %p114 = pneg %p113
    // Predicated region
    $region9: #{hexblock2_forward.1} parent=5 // pred_check
      _
    $region10: #{hexblock2_forward.1} parent=5 // pred_check_branch
      %116 = sbr.rel (%p113) target = $region12
    $region11: #{hexblock2_forward.1} parent=5 // pred_region
      %s117 = ssub.s32 %s9, 1
      // Predicated region
      $region13: #{hexblock2_forward.1} parent=11 // pred_check
        %p118 = pneg %p56
      $region14: #{hexblock2_forward.1} parent=11 // pred_check_branch
        %120 = sbr.rel (%p118) target = $region16
      $region15: #{hexblock2_forward.1} parent=11 // pred_region
        _
      $region16: #{hexblock2_forward.1} parent=11 // pred_fallthru
        _
      // Predicated region
      $region17: #{hexblock2_forward.1} parent=11 // pred_check
        %p121 = pneg %p77
      $region18: #{hexblock2_forward.1} parent=11 // pred_check_branch
        %123 = sbr.rel (%p121) target = $region20
      $region19: #{hexblock2_forward.1} parent=11 // pred_region
        _
      $region20: #{hexblock2_forward.1} parent=11 // pred_fallthru
        _
    $region12: #{hexblock2_forward.1} parent=5 // pred_fallthru
      _
    %p124 = scmp.lt.s32.totalorder %s9, 2
    // Predicated region
    $region21: #{hexblock2_forward.1} parent=5 // pred_check
      %p125 = pneg %p124
    $region22: #{hexblock2_forward.1} parent=5 // pred_check_branch
      %127 = sbr.rel (%p125) target = $region24
    $region23: #{hexblock2_forward.1} parent=5 // pred_region
      // Predicated region
      $region25: #{hexblock2_forward.1} parent=23 // pred_check
        %p128 = pneg %p29
      $region26: #{hexblock2_forward.1} parent=23 // pred_check_branch
        %130 = sbr.rel (%p128) target = $region28
      $region27: #{hexblock2_forward.1} parent=23 // pred_region
        %p131 = scmp.lt.s32.totalorder %s9, 1
        %s132 = scalar_select %p131, %s9, 1
        %s133 = smul.addr %s132, 2
        %s134 = smul.addr %s133, 4
        %s135 = scalar_lea.vmem %s0, %s134
      $region28: #{hexblock2_forward.1} parent=23 // pred_fallthru
        _
    $region24: #{hexblock2_forward.1} parent=5 // pred_fallthru
      _
    %p136 = scmp.le.s32.totalorder 1, %s9
    %p137 = scmp.lt.s32.totalorder %s9, 3
    %p138 = pnand %p136, %p137
    %p139 = pneg %p138
    // Predicated region
    $region29: #{hexblock2_forward.1} parent=5 // pred_check
      _
    $region30: #{hexblock2_forward.1} parent=5 // pred_check_branch
      %141 = sbr.rel (%p138) target = $region32
    $region31: #{hexblock2_forward.1} parent=5 // pred_region
      %s142 = ssub.s32 %s9, 1
      %p143 = scmp.lt.s32.totalorder %s14, 1
      %s144 = scalar_select %p143, %s14, 1
      %s145 = smul.addr %s144, 2
      %s146 = smul.addr %s145, 4
      %s147 = scalar_lea.vmem %s0, %s146
      %p148 = pneg %p35
      %p149 = pneg %p32
      %p150 = pneg %p56
      %p151 = pneg %p53
      %p152 = pneg %p77
      %p153 = pneg %p74
      %p154 = pneg %p103
      %p155 = pneg %p100
      %p156 = scmp.lt.s32.totalorder %s14, 1
      %s157 = scalar_select %p156, %s14, 1
      %s158 = smul.addr %s157, 2
      %s159 = smul.addr %s158, 4
      %s160 = scalar_lea.vmem %s3, %s159
      %p161 = scmp.lt.s32.totalorder %s14, 1
      %s162 = scalar_select %p161, %s14, 1
      %s163 = smul.addr %s162, 2
      %s164 = smul.addr %s163, 4
      %s165 = scalar_lea.vmem %s0, %s164
      %p166 = scmp.lt.s32.totalorder %s14, 1
      %s167 = scalar_select %p166, %s14, 1
      %s168 = smul.addr %s167, 2
      %s169 = smul.addr %s168, 4
      %s170 = scalar_lea.vmem %s3, %s169
      %v171 = vld [vmem:[%s165] sm:$0xff]
      %v172 = vlaneseq
      %v173 = vand.u32 %v172, 127
      %v174 = vadd.s32 %v173, 128
      %vm175 = vcmp.lt.s32.totalorder %v173, 0
      %v176 = vsub.s32 0, %v173
      %v177 = vsel %vm175, %v176, %v173
      %v178 = vshrl.u32 %v177, 4
      %v179 = vand.u32 %v177, 15
      %v180 = vsub.s32 0, %v179
      %v181 = vsel %vm175, %v180, %v179
      %vm182 = vcmp.lt.s32.totalorder %v174, 0
      %v183 = vsub.s32 0, %v174
      %v184 = vsel %vm182, %v183, %v174
      %v185 = vshrl.u32 %v184, 4
      %v186 = vand.u32 %v184, 15
      %v187 = vsub.s32 0, %v186
      %v188 = vsel %vm182, %v187, %v186
      %vm189 = vcmp.ne.s32.totalorder %v181, 0
      %vm190 = vcmp.ne.s32.totalorder %v188, 0
      %vm191 = vcmp.lt.s32.totalorder %v181, 0
      %vm192 = vcmp.lt.s32.totalorder %v188, 0
      %vm193 = vmand %vm191, %vm189
      %vm194 = vmand %vm192, %vm190
      %v195 = vadd.s32 %v181, 16
      %v196 = vadd.s32 %v188, 16
      %v197 = vsel %vm193, %v195, %v181
      %v198 = vsel %vm194, %v196, %v188
      %vm199 = vcmp.lt.s32.totalorder %v197, 0
      %v200 = vsub.s32 0, %v197
      %v201 = vsel %vm199, %v200, %v197
      %v202 = vshrl.u32 %v201, 1
      %v203 = vand.u32 %v201, 1
      %v204 = vsub.s32 0, %v203
      %v205 = vsel %vm199, %v204, %v203
      %vm206 = vcmp.lt.s32.totalorder %v198, 0
      %v207 = vsub.s32 0, %v198
      %v208 = vsel %vm206, %v207, %v198
      %v209 = vshrl.u32 %v208, 1
      %v210 = vand.u32 %v208, 1
      %v211 = vsub.s32 0, %v210
      %v212 = vsel %vm206, %v211, %v210
      %vm213 = vcmp.ne.s32.totalorder %v205, 0
      %vm214 = vcmp.ne.s32.totalorder %v212, 0
      %vm215 = vcmp.lt.s32.totalorder %v205, 0
      %vm216 = vcmp.lt.s32.totalorder %v212, 0
      %vm217 = vmand %vm215, %vm213
      %vm218 = vmand %vm216, %vm214
      %v219 = vadd.s32 %v205, 2
      %v220 = vadd.s32 %v212, 2
      %v221 = vsel %vm217, %v219, %v205
      %v222 = vsel %vm218, %v220, %v212
      %vm223 = vcmp.eq.s32.totalorder %v221, 0
      %vm224 = vcmp.eq.s32.totalorder %v222, 0
      %vm225 = vcmp.eq.s32.totalorder %v197, 0
      %vm226 = vcmp.eq.s32.totalorder %v198, 0
      %vm227 = vcmp.eq.s32.totalorder %v197, 15
      %vm228 = vcmp.eq.s32.totalorder %v198, 15
      %v230 = vcombine.high %v171, %v171
      %231 = vrot.lane.b32.xlu0 %v171, 16
      %v232 = vpop.permute.xlu0 %231
      %233 = vrot.lane.b32.xlu0 %v230, 16
      %v234 = vpop.permute.xlu0 %233
      %vm235 = vcmask 130048
      %v236 = vsel %vm235, %v232, %v234
      %v239 = vsel %vm235, 0.0, %v232
      %240 = vrot.lane.b32.xlu0 %v171, 112
      %v241 = vpop.permute.xlu0 %240
      %242 = vrot.lane.b32.xlu0 %v230, 112
      %v243 = vpop.permute.xlu0 %242
      %vm244 = vcmask 916480
      %v245 = vsel %vm244, %v241, %v243
      %v248 = vsel %vm244, %v243, 0.0
      %249 = vrot.lane.b32.xlu0 %v171, 1
      %v250 = vpop.permute.xlu0 %249
      %251 = vrot.lane.b32.xlu0 %v230, 1
      %v252 = vpop.permute.xlu0 %251
      %vm253 = vcmask 7168
      %v254 = vsel %vm253, %v250, %v252
      %v257 = vsel %vm253, 0.0, %v250
      %258 = vrot.lane.b32.xlu0 %v171, 127
      %v259 = vpop.permute.xlu0 %258
      %260 = vrot.lane.b32.xlu0 %v230, 127
      %v261 = vpop.permute.xlu0 %260
      %vm262 = vcmask 1039360
      %v263 = vsel %vm262, %v259, %v261
      %v266 = vsel %vm262, %v261, 0.0
      %267 = vrot.lane.b32.xlu0 %v171, 17
      %v268 = vpop.permute.xlu0 %267
      %269 = vrot.lane.b32.xlu0 %v230, 17
      %v270 = vpop.permute.xlu0 %269
      %vm271 = vcmask 138240
      %v272 = vsel %vm271, %v268, %v270
      %v275 = vsel %vm271, 0.0, %v268
      %276 = vrot.lane.b32.xlu0 %v171, 15
      %v277 = vpop.permute.xlu0 %276
      %278 = vrot.lane.b32.xlu0 %v230, 15
      %v279 = vpop.permute.xlu0 %278
      %vm280 = vcmask 121856
      %v281 = vsel %vm280, %v277, %v279
      %v284 = vsel %vm280, 0.0, %v277
      %285 = vrot.lane.b32.xlu0 %v171, 113
      %v286 = vpop.permute.xlu0 %285
      %287 = vrot.lane.b32.xlu0 %v230, 113
      %v288 = vpop.permute.xlu0 %287
      %vm289 = vcmask 924672
      %v290 = vsel %vm289, %v286, %v288
      %v293 = vsel %vm289, %v288, 0.0
      %294 = vrot.lane.b32.xlu0 %v171, 111
      %v295 = vpop.permute.xlu0 %294
      %296 = vrot.lane.b32.xlu0 %v230, 111
      %v297 = vpop.permute.xlu0 %296
      %vm298 = vcmask 908288
      %v299 = vsel %vm298, %v295, %v297
      %v302 = vsel %vm298, %v297, 0.0
      %v303 = vsel %vm223, %v275, %v257
      %v304 = vsel %vm224, %v272, %v254
      %v305 = vsel %vm225, 0.0, %v303
      %v306 = vsel %vm226, 0.0, %v304
      %v307 = vsel %vm223, %v284, %v263
      %v308 = vsel %vm224, %v281, %v266
      %v309 = vsel %vm227, 0.0, %v307
      %v310 = vsel %vm228, 0.0, %v308
      %v311 = vsel %vm223, %v257, %v290
      %v312 = vsel %vm224, %v254, %v293
      %v313 = vsel %vm225, 0.0, %v311
      %v314 = vsel %vm226, 0.0, %v312
      %v315 = vsel %vm223, %v263, %v299
      %v316 = vsel %vm224, %v266, %v302
      %v317 = vsel %vm227, 0.0, %v315
      %v318 = vsel %vm228, 0.0, %v316
      %v319 = vcombine.low %v171, %v171
      %v323 = vrot.slane %v305, 4
      %v324 = vrot.slane %v306, 4
      %v329 = vrot.slane %v313, 4
      %v330 = vrot.slane %v314, 4
      %vm333 = vcmask 1043456
      %v334 = vsel %vm333, %v239, %v319
      %v335 = vsel %vm333, %v236, %v171
      %v336 = vsel %vm333, %v245, %v323
      %v337 = vsel %vm333, %v248, %v324
      %v338 = vsel %vm333, %v309, %v329
      %v339 = vsel %vm333, %v310, %v330
      %v340 = vld [vmem:[%s1] sm:$0xf]
      %v341 = vld [vmem:[%s2] sm:$0xf]
      %343 = vset.pattern.permute.xlu0 0
      %344 = vperm.xlu0 %343, %v341
      %v345 = vpop.permute.xlu0 %344
      %vm347 = vcmask 228352
      %v349 = vsel %vm347, %v340, 0
      %v352 = vsel %vm333, %v317, 0
      %v355 = vsel %vm333, %v318, 0
      %357 = vmatprep.subr.mxu0 %v335
      %358 = vmatpush1.msra.mxu0 %v334
      %359 = vmatprep.subr.mxu0 %v337
      %360 = vmatpush1.msra.mxu0 %v336
      %361 = vmatprep.subr.mxu0 %v339
      %362 = vmatpush1.msra.mxu0 %v338
      %363 = vmatprep.subr.mxu0 %v355
      %364 = vmatpush1.msra.mxu0 %v352
      %365 = vmatprep.subr.mxu0 0.0
      %366 = vmatpush1.msra.mxu0 0.0
      %367 = vmatprep.subr.mxu0 0.0
      %368 = vmatpush1.msra.mxu0 0.0
      %369 = vmatprep.subr.mxu0 0.0
      %370 = vmatpush1.msra.mxu0 0.0
      %371 = vmatprep.subr.mxu0 0.0
      %372 = vmatpush1.msra.mxu0 0.0
      %373 = vmatprep.subr.mxu0 0.0
      %374 = vmatpush1.msra.mxu0 0.0
      %375 = vmatprep.subr.mxu0 0.0
      %376 = vmatpush1.msra.mxu0 0.0
      %377 = vmatprep.subr.mxu0 0.0
      %378 = vmatpush1.msra.mxu0 0.0
      %379 = vmatprep.subr.mxu0 0.0
      %380 = vmatpush1.msra.mxu0 0.0
      %381 = vmatprep.subr.mxu0 0.0
      %382 = vmatpush1.msra.mxu0 0.0
      %383 = vmatprep.subr.mxu0 0.0
      %384 = vmatpush1.msra.mxu0 0.0
      %385 = vmatprep.subr.mxu0 0.0
      %386 = vmatpush1.msra.mxu0 0.0
      %387 = vmatprep.subr.mxu0 0.0
      %388 = vmatpush1.msra.mxu0 0.0
      %389 = vmatprep.subr.mxu0 0.0
      %390 = vmatpush1.msra.mxu0 0.0
      %391 = vmatprep.subr.mxu0 0.0
      %392 = vmatpush1.msra.mxu0 0.0
      %393 = vmatprep.subr.mxu0 0.0
      %394 = vmatpush1.msra.mxu0 0.0
      %395 = vmatprep.subr.mxu0 0.0
      %396 = vmatpush1.msra.mxu0 0.0
      %397 = vmatprep.subr.mxu0 0.0
      %398 = vmatpush1.msra.mxu0 0.0
      %399 = vmatprep.subr.mxu0 0.0
      %400 = vmatpush1.msra.mxu0 0.0
      %401 = vmatprep.subr.mxu0 0.0
      %402 = vmatpush1.msra.mxu0 0.0
      %403 = vmatprep.subr.mxu0 0.0
      %404 = vmatpush1.msra.mxu0 0.0
      %405 = vmatprep.subr.mxu0 0.0
      %406 = vmatpush1.msra.mxu0 0.0
      %407 = vmatprep.subr.mxu0 0.0
      %408 = vmatpush1.msra.mxu0 0.0
      %409 = vmatprep.subr.mxu0 0.0
      %410 = vmatpush1.msra.mxu0 0.0
      %411 = vmatprep.subr.mxu0 0.0
      %412 = vmatpush1.msra.mxu0 0.0
      %413 = vmatprep.subr.mxu0 0.0
      %414 = vmatpush1.msra.mxu0 0.0
      %415 = vmatprep.subr.mxu0 0.0
      %416 = vmatpush1.msra.mxu0 0.0
      %417 = vmatprep.subr.mxu0 0.0
      %418 = vmatpush1.msra.mxu0 0.0
      %419 = vmatprep.subr.mxu0 0.0
      %420 = vmatpush1.msra.mxu0 0.0
      %421 = vmatprep.mubr.f32.mxu0 0.0
      %422 = vmatmul.mubr.f32.gmra.mrb[0].mxu0 %v349
      %v423 = vpop.f32.mrb[0].mxu0
      %v424 = vadd.f32 %v345, %v423
      %v425 = vpop.f32.mrb[0].mxu0
      %v426 = vadd.f32 %v345, %v425
      %427 = vdwg.mxu0
      %v429 = vadd.f32 %v424, %v171
      %v430 = vadd.f32 %v426, %v230
      %v431 = vmax.f32 %v429, 0.0
      %v432 = vmax.f32 %v430, 0.0
      %v435 = vcombine.low %v431, %v432
      %437 = vst [vmem:[%s170] sm:$0xff] %v435
      %p438 = scmp.lt.s32.totalorder %s14, 1
      %s439 = scalar_select %p438, %s14, 1
      %s440 = smul.addr %s439, 2
      %s441 = smul.addr %s440, 4
      %s442 = scalar_lea.vmem %s3, %s441
      // Predicated region
      $region33: #{hexblock2_forward.1} parent=31 // pred_check
        %p443 = pneg %p100
      $region34: #{hexblock2_forward.1} parent=31 // pred_check_branch
        %445 = sbr.rel (%p443) target = $region36
      $region35: #{hexblock2_forward.1} parent=31 // pred_region
        _
      $region36: #{hexblock2_forward.1} parent=31 // pred_fallthru
        _
    $region32: #{hexblock2_forward.1} parent=5 // pred_fallthru
      _
    %p446 = scmp.le.s32.totalorder 2, %s9
    // Predicated region
    $region37: #{hexblock2_forward.1} parent=5 // pred_check
      %p447 = pneg %p446
    $region38: #{hexblock2_forward.1} parent=5 // pred_check_branch
      %449 = sbr.rel (%p447) target = $region40
    $region39: #{hexblock2_forward.1} parent=5 // pred_region
      %s450 = ssub.s32 %s9, 2
      // Predicated region
      $region41: #{hexblock2_forward.1} parent=39 // pred_check
        %p451 = pneg %p106
      $region42: #{hexblock2_forward.1} parent=39 // pred_check_branch
        %453 = sbr.rel (%p451) target = $region44
      $region43: #{hexblock2_forward.1} parent=39 // pred_region
        %p454 = scmp.lt.s32.totalorder %s15, 1
        %s455 = scalar_select %p454, %s15, 1
        %s456 = smul.addr %s455, 2
        %s457 = smul.addr %s456, 4
        %s458 = scalar_lea.vmem %s3, %s457
      $region44: #{hexblock2_forward.1} parent=39 // pred_fallthru
        _
    $region40: #{hexblock2_forward.1} parent=5 // pred_fallthru
      _
  $region6: #{hexblock2_forward.1} parent=0 // loop_footer
    %s13 = sadd.s32 1, %s9
  $region7: #{hexblock2_forward.1} parent=0 // loop_footer_branch
    %8 = sbr.rel target = $region3
  $region8: #{hexblock2_forward.1} parent=0 // loop_exit
    _

</llo_original>
